<compile_context>
chip_gen: v7x
topology: tpu7x:2x2x1
jax: 0.10.0
libtpu: 0.0.40
codegen_flags: <defaults>
</compile_context>

<pallas_src>
import functools
import math

import jax
import jax.numpy as jnp
from jax.experimental import pallas as pl
from jax.experimental.pallas import tpu as pltpu

NEG_SLOPE = 0.2
EPS = 1e-8
FACTORS = [1, 1, 1, 1, 1 / 2, 1 / 4, 1 / 8, 1 / 16, 1 / 32]

VMEM_SPEC = pl.BlockSpec(memory_space=pltpu.MemorySpace.VMEM)


# ----------------------------- in-kernel helpers -----------------------------

def _leaky(x):
    return jnp.where(x >= 0.0, x, NEG_SLOPE * x)


def _pixelnorm(x):
    return x * jax.lax.rsqrt(jnp.mean(x * x, axis=-1, keepdims=True) + EPS)


def _upsample2x(x):
    """Nearest-neighbour 2x upsample of an NHWC value, fully in VMEM/vregs."""
    n, h, w, c = x.shape
    x = jnp.broadcast_to(x[:, :, None, :, :], (n, h, 2, w, c)).reshape(n, 2 * h, w, c)
    x = jnp.broadcast_to(x[:, :, :, None, :], (n, 2 * h, w, 2, c)).reshape(n, 2 * h, 2 * w, c)
    return x


def _conv3x3_valid(x, w_ref, b):
    """VALID 3x3 conv of an f32 NHWC value -> (rows, Cout) f32.

    Weight scale is pre-folded into `w_ref` (bf16); matmuls are bf16 x bf16
    with f32 accumulation; the accumulator is initialized by the first tap
    (no explicit zeros pass).
    """
    n, hp, wp, cin = x.shape
    ho, wo = hp - 2, wp - 2
    rows = n * ho * wo
    acc = None
    for ky in range(3):
        for kx in range(3):
            patch = x[:, ky:ky + ho, kx:kx + wo, :].reshape(rows, cin)
            contrib = jnp.dot(patch.astype(jnp.bfloat16), w_ref[ky, kx],
                              preferred_element_type=jnp.float32)
            acc = contrib if acc is None else acc + contrib
    return acc + b


# ------------------------------ Pallas kernels --------------------------------

def _initial_convt_kernel(z_ref, w_ref, b_ref, o_ref):
    """PixelNorm(z) -> ConvTranspose2d(z_dim, C, 4, 1, 0) (one matmul) -> LeakyReLU."""
    z = z_ref[...]                                                     # (N, Z) f32
    zn = z * jax.lax.rsqrt(jnp.mean(z * z, axis=-1, keepdims=True) + EPS)
    y = jnp.dot(zn.astype(jnp.bfloat16), w_ref[...],
                preferred_element_type=jnp.float32) + b_ref[...]
    o_ref[...] = _leaky(y)                                             # (N, 16*C)


def _wsconv3x3_same_kernel(xp_ref, w_ref, b_ref, o_ref, *, use_pn):
    """WSConv2d 3x3 (SAME via pre-padded input) + LeakyReLU + optional PixelNorm."""
    acc = _leaky(_conv3x3_valid(xp_ref[...], w_ref, b_ref[...]))
    if use_pn:
        acc = _pixelnorm(acc)
    o_ref[...] = acc                                                   # (rows, Cout)


def _rgb1x1_kernel(x_ref, w_ref, b_ref, o_ref):
    """WSConv2d 1x1 to-RGB (steps == 0 path)."""
    o_ref[...] = jnp.dot(x_ref[...].astype(jnp.bfloat16), w_ref[...],
                         preferred_element_type=jnp.float32) + b_ref[...]


def _prog_block_kernel(xp_ref, mask_ref, w1_ref, b1_ref, w2_ref, b2_ref, o_ref):
    """Fused block: upsample2x -> conv1 -> LReLU -> PN -> conv2 -> LReLU -> PN."""
    n, hp, wp, _ = xp_ref.shape                     # low-res input, pre-padded by 1
    cout = w2_ref.shape[-1]
    h1, w1 = 2 * hp - 2, 2 * wp - 2                 # conv1 output extent (2H+2, 2W+2)
    u = _upsample2x(xp_ref[...])                    # == pad(upsample(x), 2), f32
    a1 = _pixelnorm(_leaky(_conv3x3_valid(u, w1_ref, b1_ref[...])))
    hmid = a1.reshape(n, h1, w1, cout) * mask_ref[...]   # zero ring = conv2 SAME pad
    o_ref[...] = _pixelnorm(_leaky(_conv3x3_valid(hmid, w2_ref, b2_ref[...])))


def _prog_block_fade_kernel(xp_ref, mask_ref, w1_ref, b1_ref, w2_ref, b2_ref,
                            wu_ref, bu_ref, wg_ref, bg_ref, o_ref, *, alpha):
    """Last block fused with both to-RGB 1x1 convs, the alpha fade and tanh."""
    n, hp, wp, cin = xp_ref.shape
    cout = w2_ref.shape[-1]
    h1, w1 = 2 * hp - 2, 2 * wp - 2
    ho, wo = h1 - 2, w1 - 2
    u = _upsample2x(xp_ref[...])
    a1 = _pixelnorm(_leaky(_conv3x3_valid(u, w1_ref, b1_ref[...])))
    hmid = a1.reshape(n, h1, w1, cout) * mask_ref[...]
    out = _pixelnorm(_leaky(_conv3x3_valid(hmid, w2_ref, b2_ref[...])))   # (rows, Cout)
    up = u[:, 2:2 + ho, 2:2 + wo, :].reshape(n * ho * wo, cin)            # = upsample(x)
    yu = jnp.dot(up.astype(jnp.bfloat16), wu_ref[...],
                 preferred_element_type=jnp.float32) + bu_ref[...]
    yg = jnp.dot(out.astype(jnp.bfloat16), wg_ref[...],
                 preferred_element_type=jnp.float32) + bg_ref[...]
    o_ref[...] = jnp.tanh(alpha * yg + (1.0 - alpha) * yu)               # (rows, 3)


# ------------------------------ kernel wrappers --------------------------------

def _call(kernel, out_shape, args, *, flops=0, transcendentals=0):
    in_bytes = sum(int(a.size) * a.dtype.itemsize for a in args)
    out_bytes = 4 * math.prod(out_shape)
    return pl.pallas_call(
        kernel,
        out_shape=jax.ShapeDtypeStruct(out_shape, jnp.float32),
        in_specs=[VMEM_SPEC] * len(args),
        out_specs=VMEM_SPEC,
        cost_estimate=pl.CostEstimate(flops=int(flops),
                                      transcendentals=int(transcendentals),
                                      bytes_accessed=int(in_bytes + out_bytes)),
    )(*args)


def _pad1(x):
    """Zero-pad the (small) low-res NHWC activation by 1 pixel (wrapper-side)."""
    return jnp.pad(x, ((0, 0), (1, 1), (1, 1), (0, 0)))


def _ring_mask(h, w):
    """(1, h, w, 1) mask: 1 in the interior, 0 on the 1-pixel border ring."""
    m = jnp.pad(jnp.ones((h - 2, w - 2), jnp.float32), ((1, 1), (1, 1)))
    return m.reshape(1, h, w, 1)


# -------------------------------- parameters -----------------------------------

def ws_scale(cin, k):
    return (2.0 / (cin * k * k)) ** 0.5


def init_generator_params(key, z_dim, in_channels, img_channels, num_blocks):
    """Deterministic synthetic init (WSConv weights ~ N(0,1), biases zero)."""
    keys = jax.random.split(key, 4 + 3 * num_blocks)
    C = in_channels
    p = {
        'in_channels': C,
        'ct_w': jax.random.normal(keys[0], (z_dim, 4, 4, C), jnp.float32) * 0.2,
        'ct_b': jax.random.normal(keys[1], (C,), jnp.float32) * 0.1,
        'init_w': jax.random.normal(keys[2], (3, 3, C, C), jnp.float32),
        'init_b': jnp.zeros((C,), jnp.float32),
    }
    rgb = [{'w': jax.random.normal(keys[3], (C, img_channels), jnp.float32),
            'b': jnp.zeros((img_channels,), jnp.float32),
            'scale': ws_scale(C, 1)}]
    prog = []
    k = 4
    for i in range(num_blocks):
        cin = int(in_channels * FACTORS[i])
        cout = int(in_channels * FACTORS[i + 1])
        prog.append({
            'w1': jax.random.normal(keys[k], (3, 3, cin, cout), jnp.float32),
            'b1': jnp.zeros((cout,), jnp.float32),
            's1': ws_scale(cin, 3),
            'w2': jax.random.normal(keys[k + 1], (3, 3, cout, cout), jnp.float32),
            'b2': jnp.zeros((cout,), jnp.float32),
            's2': ws_scale(cout, 3),
        })
        rgb.append({'w': jax.random.normal(keys[k + 2], (cout, img_channels), jnp.float32),
                    'b': jnp.zeros((img_channels,), jnp.float32),
                    'scale': ws_scale(cout, 1)})
        k += 3
    p['rgb'] = rgb
    p['prog'] = prog
    return p


# ------------------------------- forward pass -----------------------------------

def generator_forward(params, x_nchw, alpha, steps):
    """x_nchw: (N, z_dim, 1, 1); returns an NCHW image, matching the PyTorch module."""
    C = params['in_channels']
    img_c = params['rgb'][0]['w'].shape[-1]
    N = x_nchw.shape[0]
    z = x_nchw.reshape(N, -1)
    Z = z.shape[1]

    # self.initial: PixelNorm -> ConvT(4x4) -> LeakyReLU   (fused kernel)
    ctw = params['ct_w'].reshape(Z, 16 * C).astype(jnp.bfloat16)
    ctb = jnp.broadcast_to(params['ct_b'], (4, 4, C)).reshape(1, 16 * C)
    t = _call(_initial_convt_kernel, (N, 16 * C), (z, ctw, ctb),
              flops=2 * N * Z * 16 * C, transcendentals=N)
    out = t.reshape(N, 4, 4, C)

    #              -> WSConv3x3 -> LeakyReLU -> PixelNorm  (second kernel)
    w0 = (params['init_w'] * ws_scale(C, 3)).astype(jnp.bfloat16)
    out = _call(functools.partial(_wsconv3x3_same_kernel, use_pn=True),
                (N * 16, C), (_pad1(out), w0, params['init_b'].reshape(1, C)),
                flops=2 * N * 16 * 9 * C * C,
                transcendentals=N * 16).reshape(N, 4, 4, C)

    if steps == 0:
        r = params['rgb'][0]
        wr = (r['w'] * r['scale']).astype(jnp.bfloat16)
        y = _call(_rgb1x1_kernel, (N * 16, img_c),
                  (out.reshape(N * 16, C), wr, r['b'].reshape(1, img_c)),
                  flops=2 * N * 16 * C * img_c)
        return jnp.transpose(y.reshape(N, 4, 4, img_c), (0, 3, 1, 2))

    y_img = None
    for step in range(steps):
        blk = params['prog'][step]
        _, Hin, Win, Cin = out.shape
        Cout = blk['w1'].shape[-1]
        Ho, Wo = 2 * Hin, 2 * Win
        rows1 = N * (Ho + 2) * (Wo + 2)
        rows2 = N * Ho * Wo
        xp = _pad1(out)                               # pad LOW-RES input by 1
        mask = _ring_mask(Ho + 2, Wo + 2)
        w1 = (blk['w1'] * blk['s1']).astype(jnp.bfloat16)   # WS scale folded, bf16
        w2 = (blk['w2'] * blk['s2']).astype(jnp.bfloat16)
        b1 = blk['b1'].reshape(1, Cout)
        b2 = blk['b2'].reshape(1, Cout)
        conv_flops = 2 * rows1 * 9 * Cin * Cout + 2 * rows2 * 9 * Cout * Cout

        if step < steps - 1:
            out = _call(_prog_block_kernel, (rows2, Cout),
                        (xp, mask, w1, b1, w2, b2),
                        flops=conv_flops,
                        transcendentals=rows1 + rows2).reshape(N, Ho, Wo, Cout)
        else:
            ru, rg = params['rgb'][steps - 1], params['rgb'][steps]
            wu = (ru['w'] * ru['scale']).astype(jnp.bfloat16)
            wg = (rg['w'] * rg['scale']).astype(jnp.bfloat16)
            kern = functools.partial(_prog_block_fade_kernel, alpha=float(alpha))
            y = _call(kern, (rows2, img_c),
                      (xp, mask, w1, b1, w2, b2,
                       wu, ru['b'].reshape(1, img_c), wg, rg['b'].reshape(1, img_c)),
                      flops=conv_flops + 2 * rows2 * (Cin + Cout) * img_c,
                      transcendentals=rows1 + rows2 + rows2 * img_c)
            y_img = y.reshape(N, Ho, Wo, img_c)

    return jnp.transpose(y_img, (0, 3, 1, 2))                 # back to NCHW


# ------------------------------ pure-JAX reference -------------------------------

def _ref_forward(params, x_nchw, alpha, steps, matmul_dtype=jnp.bfloat16):
    """Reference forward.  matmul_dtype=bf16 matches the kernels' MXU numerics;
    matmul_dtype=f32 (HIGHEST) is the module-faithful full-precision reference."""
    C = params['in_channels']
    N = x_nchw.shape[0]
    md = matmul_dtype
    prec = jax.lax.Precision.HIGHEST if md == jnp.float32 else jax.lax.Precision.DEFAULT

    def pn(x):
        return x * jax.lax.rsqrt(jnp.mean(x * x, axis=-1, keepdims=True) + EPS)

    def leaky(x):
        return jnp.where(x >= 0, x, NEG_SLOPE * x)

    def conv3(x, w, b, s):
        y = jax.lax.conv_general_dilated(
            x.astype(md), (w * s).astype(md), (1, 1), 'SAME',
            dimension_numbers=('NHWC', 'HWIO', 'NHWC'),
            preferred_element_type=jnp.float32, precision=prec)
        return y + b.reshape(1, 1, 1, -1)

    def conv1(x, w, b, s):
        y = jnp.einsum('nhwc,cd->nhwd', x.astype(md), (w * s).astype(md),
                       preferred_element_type=jnp.float32, precision=prec)
        return y + b.reshape(1, 1, 1, -1)

    z = x_nchw.reshape(N, -1)
    zn = z * jax.lax.rsqrt(jnp.mean(z * z, axis=-1, keepdims=True) + EPS)
    ctw = params['ct_w'].reshape(z.shape[1], 16 * C)
    t = jnp.dot(zn.astype(md), ctw.astype(md),
                preferred_element_type=jnp.float32, precision=prec)
    out = leaky(t.reshape(N, 4, 4, C) + params['ct_b'].reshape(1, 1, 1, C))
    out = pn(leaky(conv3(out, params['init_w'], params['init_b'], ws_scale(C, 3))))
    if steps == 0:
        r = params['rgb'][0]
        return jnp.transpose(conv1(out, r['w'], r['b'], r['scale']), (0, 3, 1, 2))
    upscaled = out
    for step in range(steps):
        upscaled = jnp.repeat(jnp.repeat(out, 2, axis=1), 2, axis=2)
        blk = params['prog'][step]
        h = pn(leaky(conv3(upscaled, blk['w1'], blk['b1'], blk['s1'])))
        out = pn(leaky(conv3(h, blk['w2'], blk['b2'], blk['s2'])))
    ru, rg = params['rgb'][steps - 1], params['rgb'][steps]
    fu = conv1(upscaled, ru['w'], ru['b'], ru['scale'])
    fo = conv1(out, rg['w'], rg['b'], rg['scale'])
    return jnp.transpose(jnp.tanh(alpha * fo + (1.0 - alpha) * fu), (0, 3, 1, 2))


# ------------------------------------ demo ----------------------------------------

if __name__ == "__main__":
    key = jax.random.PRNGKey(0)
    k_params, k_x = jax.random.split(key)

    z_dim, in_channels, img_channels = 32, 16, 3
    N, alpha = 2, 0.6

    params = init_generator_params(k_params, z_dim, in_channels, img_channels,
                                   num_blocks=3)
    x = jax.random.normal(k_x, (N, z_dim, 1, 1), jnp.float32)

    for steps in (0, 1, 2):
        y = jax.block_until_ready(generator_forward(params, x, alpha, steps))
        H = 4 * (2 ** steps)
        assert y.shape == (N, img_channels, H, H), y.shape

        # Tight check vs a reference with matched bf16-MXU / f32-accum numerics.
        y_ref = _ref_forward(params, x, alpha, steps, matmul_dtype=jnp.bfloat16)
        err = float(jnp.max(jnp.abs(y - y_ref)))
        assert err < 3e-3, f"steps={steps}: mismatch vs bf16-matched reference: {err}"

        # Loose sanity check vs the full-f32 module-faithful reference.
        y_ref32 = _ref_forward(params, x, alpha, steps, matmul_dtype=jnp.float32)
        err32 = float(jnp.max(jnp.abs(y - y_ref32)))
        assert err32 < 0.25, f"steps={steps}: mismatch vs f32 reference: {err32}"

    print("KERNEL_OK")
</pallas_src>

<mosaic_0001>
module attributes {stable_mosaic.version = 11 : i64} {
  func.func @_initial_convt_kernel(%arg0: memref<2x32xf32, #tpu.memory_space<vmem>>, %arg1: memref<32x256xbf16, #tpu.memory_space<vmem>>, %arg2: memref<1x256xf32, #tpu.memory_space<vmem>>, %arg3: memref<2x256xf32, #tpu.memory_space<vmem>>) attributes {dimension_semantics = [], scalar_prefetch = 0 : i64, scratch_operands = 0 : i64, tpu.core_type = #tpu.core_type<tc>} {
    %c0 = arith.constant 0 : index
    %c0_0 = arith.constant 0 : index
    %0 = vector.load %arg0[%c0, %c0_0] : memref<2x32xf32, #tpu.memory_space<vmem>>, vector<2x32xf32>
    %1 = arith.mulf %0, %0 : vector<2x32xf32>
    %cst = arith.constant dense<0.000000e+00> : vector<2xf32>
    %2 = vector.multi_reduction <add>, %1, %cst [1] : vector<2x32xf32> to vector<2xf32>
    %3 = vector.shape_cast %2 : vector<2xf32> to vector<2x1xf32>
    %cst_1 = arith.constant 3.200000e+01 : f32
    %4 = vector.broadcast %cst_1 : f32 to vector<2x1xf32>
    %5 = arith.divf %3, %4 : vector<2x1xf32>
    %cst_2 = arith.constant 9.99999993E-9 : f32
    %6 = vector.broadcast %cst_2 : f32 to vector<2x1xf32>
    %7 = arith.addf %5, %6 : vector<2x1xf32>
    %8 = math.rsqrt %7 : vector<2x1xf32>
    %9 = vector.broadcast %8 : vector<2x1xf32> to vector<2x32xf32>
    %10 = arith.mulf %0, %9 : vector<2x32xf32>
    %11 = arith.truncf %10 : vector<2x32xf32> to vector<2x32xbf16>
    %c0_3 = arith.constant 0 : index
    %c0_4 = arith.constant 0 : index
    %12 = vector.load %arg1[%c0_3, %c0_4] : memref<32x256xbf16, #tpu.memory_space<vmem>>, vector<32x256xbf16>
    %cst_5 = arith.constant dense<0.000000e+00> : vector<2x256xf32>
    %13 = tpu.matmul %11, %12, %cst_5 {dimension_numbers = #tpu.dot_dimension_numbers<[1], [0], [0], [1], [0, 0, 1, 1], [], []>} : vector<2x32xbf16>, vector<32x256xbf16>, vector<2x256xf32> -> vector<2x256xf32>
    %c0_6 = arith.constant 0 : index
    %c0_7 = arith.constant 0 : index
    %14 = vector.load %arg2[%c0_6, %c0_7] : memref<1x256xf32, #tpu.memory_space<vmem>>, vector<1x256xf32>
    %15 = vector.broadcast %14 : vector<1x256xf32> to vector<2x256xf32>
    %16 = arith.addf %13, %15 : vector<2x256xf32>
    %cst_8 = arith.constant 0.000000e+00 : f32
    %17 = vector.broadcast %cst_8 : f32 to vector<2x256xf32>
    %18 = arith.cmpf oge, %16, %17 : vector<2x256xf32>
    %cst_9 = arith.constant 2.000000e-01 : f32
    %19 = vector.broadcast %cst_9 : f32 to vector<2x256xf32>
    %20 = arith.mulf %19, %16 : vector<2x256xf32>
    %21 = arith.select %18, %16, %20 : vector<2x256xi1>, vector<2x256xf32>
    %c0_10 = arith.constant 0 : index
    %c0_11 = arith.constant 0 : index
    %22 = vector.load %arg3[%c0_10, %c0_11] : memref<2x256xf32, #tpu.memory_space<vmem>>, vector<2x256xf32>
    tpu.vector_store %arg3[%c0_10, %c0_11], %21 {strides = array<i32>} : memref<2x256xf32, #tpu.memory_space<vmem>>, vector<2x256xf32>,
    return
  }
}

</mosaic_0001>

<llo_original>
// kernel: tpu_custom_call.1
$region0: #{tpu_custom_call.1}
  #allocation0 [shape = 'u32[]', space=smem, size = 0x4, offset = 0x4, fixed_abs, tag = 'smem constant byte address 0x4 - core index']
  #allocation1 [shape = 'u32[144,128]{1,0:T(1,128)}', space=vmem, size = 0x12000, scoped, tag = 'internal scratch']
  %s0 = inlined_call_operand.hbm [shape: f32[2,32], index: 0, kind: input, shape index: {}]
  %s1 = inlined_call_operand.hbm [shape: bf16[32,256], index: 1, kind: input, shape index: {}]
  %s2 = inlined_call_operand.vmem [shape: f32[1,256], index: 2, kind: input, shape index: {}]
  %s3 = inlined_call_operand.hbm [shape: f32[2,256], index: 3, kind: output, shape index: {}]
  %s4 = sld [smem:[#allocation0]]
  $region30: #{tpu_custom_call.1} parent=0
    _
  %s6 = ssub.s32 1, %s4
  %s7 = scalar_select 0, %s6, %s4
  $region1: #{tpu_custom_call.1} parent=0
    #allocation2 [shape = 'u8[1024]{0}', space=vmem, size = 0x400, scoped, tag = 'input window, operand 0, single buffered']
    #allocation3 [shape = 's32[1]{0}', space=sflag, size = 0x4, scoped, tag = 'scoped memory for tpu_custom_call.1']
    #allocation4 [shape = 's32[1]{0}', space=sflag, size = 0x4, scoped, tag = 'scoped memory for tpu_custom_call.1']
    #allocation5 [shape = 'u8[16384]{0}', space=vmem, size = 0x4000, scoped, tag = 'input window, operand 1, single buffered']
    #allocation6 [shape = 's32[1]{0}', space=sflag, size = 0x4, scoped, tag = 'scoped memory for tpu_custom_call.1']
    #allocation7 [shape = 'u8[2048]{0}', space=vmem, size = 0x800, scoped, tag = 'output window, operand 0, single buffered']
    %8 = vsyncpa [#allocation3], 0
    %9 = vsyncpa [#allocation6], 0
    %10 = vsyncpa [#allocation4], 0
    // Predicated region
    $region2: #{tpu_custom_call.1} parent=1 // pred_check
      _
    $region3: #{tpu_custom_call.1} parent=1 // pred_check_branch
      %12 = sbr.rel (0) target = $region5
    $region4: #{tpu_custom_call.1} parent=1 // pred_region
      %s14 = ssub.s32 32, 32
      %15 = vsyncadd [#allocation3], %s14
      %s17 = sshll.u32 [#allocation2], 4
      %s18 = int_to_ptr.vmem [resolvable:$true] %s17
      %20 = dma.hbm_to_vmem [thread:$0]  %s0, 32, %s18, [#allocation3]
    $region5: #{tpu_custom_call.1} parent=1 // pred_fallthru
      _
    // Predicated region
    $region6: #{tpu_custom_call.1} parent=1 // pred_check
      _
    $region7: #{tpu_custom_call.1} parent=1 // pred_check_branch
      %22 = sbr.rel (0) target = $region9
    $region8: #{tpu_custom_call.1} parent=1 // pred_region
      %s24 = ssub.s32 512, 512
      %25 = vsyncadd [#allocation6], %s24
      %s26 = sshll.u32 [#allocation5], 4
      %s27 = int_to_ptr.vmem [resolvable:$true] %s26
      %32 = dma.hbm_to_vmem [thread:$0]  %s1, 512, %s27, [#allocation6], 128, 128, 8
    $region9: #{tpu_custom_call.1} parent=1 // pred_fallthru
      _
    // Predicated region
    $region10: #{tpu_custom_call.1} parent=1 // pred_check
      _
    $region11: #{tpu_custom_call.1} parent=1 // pred_check_branch
      %34 = sbr.rel (0) target = $region13
    $region12: #{tpu_custom_call.1} parent=1 // pred_region
      _
    $region13: #{tpu_custom_call.1} parent=1 // pred_fallthru
      _
    // Predicated region
    $region14: #{tpu_custom_call.1} parent=1 // pred_check
      _
    $region15: #{tpu_custom_call.1} parent=1 // pred_check_branch
      %36 = sbr.rel (0) target = $region17
    $region16: #{tpu_custom_call.1} parent=1 // pred_region
      %37 = dma.done [#allocation3], 32
    $region17: #{tpu_custom_call.1} parent=1 // pred_fallthru
      _
    // Predicated region
    $region18: #{tpu_custom_call.1} parent=1 // pred_check
      _
    $region19: #{tpu_custom_call.1} parent=1 // pred_check_branch
      %39 = sbr.rel (0) target = $region21
    $region20: #{tpu_custom_call.1} parent=1 // pred_region
      %40 = dma.done [#allocation6], 512
    $region21: #{tpu_custom_call.1} parent=1 // pred_fallthru
      _
    %v42 = vld [vmem:[#allocation2] sm:$0x3]
    %v43 = vmul.f32 %v42, %v42
    %vm44 = vcmask 254976
    %v45 = vsel %vm44, %v43, 0.0
    %46 = vadd.xlane.f32.xlu0 %v45
    %v47 = vpop.xlane.xlu0 %46
    %v48 = vrcp.pop 32.0
    %v49 = vmul.f32 %v47, %v48
    %v50 = vadd.f32 %v49, 1e-08
    %v51 = vrsqrt.pop %v50
    %v52 = vmul.f32 %v42, %v51
    %v53 = vpack.c.bf16 %v52, %v52
    %v54 = vld [vmem:[#allocation5] sm:$0xff]
    %v55 = vld [vmem:[#allocation5 + $0x8] sm:$0xff]
    %v56 = vld [vmem:[#allocation5 + $0x10] sm:$0xff]
    %v57 = vld [vmem:[#allocation5 + $0x18] sm:$0xff]
    %v58 = vld [vmem:[%s2] sm:$0x3]
    %v60 = vlaneseq
    %v61 = vshrl.u32 %v60, 7
    %v62 = vsub.s32 0, %v61
    %v63 = vrot.slane %v58, %v62
    %v64 = vlaneseq
    %v65 = vshrl.u32 %v64, 7
    %v66 = vsub.s32 1, %v65
    %v67 = vrot.slane %v58, %v66
    %v74 = vunpack.c.l.b16 %v54
    %v75 = vunpack.c.h.b16 %v54
    %v76 = vunpack.c.l.b16 %v55
    %v77 = vunpack.c.h.b16 %v55
    %v78 = vunpack.c.l.b16 %v56
    %v79 = vunpack.c.h.b16 %v56
    %v80 = vunpack.c.l.b16 %v57
    %v81 = vunpack.c.h.b16 %v57
    %v82 = vpack.c.b16 %v76, %v74
    %v83 = vpack.c.b16 %v77, %v75
    %v84 = vpack.c.b16 %v80, %v78
    %v85 = vpack.c.b16 %v81, %v79
    %vm90 = vcmask 261120
    %v92 = vsel %vm90, %v53, 0
    %94 = vmatprep.subr.bf16.mxu0 %v83
    %95 = vmatpush1.bf16.msra.mxu0 %v82
    %96 = vmatprep.subr.bf16.mxu0 %v85
    %97 = vmatpush1.bf16.msra.mxu0 %v84
    %98 = vmatprep.subr.bf16.mxu0 0
    %99 = vmatpush1.bf16.msra.mxu0 0
    %100 = vmatprep.subr.bf16.mxu0 0
    %101 = vmatpush1.bf16.msra.mxu0 0
    %102 = vmatprep.subr.bf16.mxu0 0
    %103 = vmatpush1.bf16.msra.mxu0 0
    %104 = vmatprep.subr.bf16.mxu0 0
    %105 = vmatpush1.bf16.msra.mxu0 0
    %106 = vmatprep.subr.bf16.mxu0 0
    %107 = vmatpush1.bf16.msra.mxu0 0
    %108 = vmatprep.subr.bf16.mxu0 0
    %109 = vmatpush1.bf16.msra.mxu0 0
    %110 = vmatprep.subr.bf16.mxu0 0
    %111 = vmatpush1.bf16.msra.mxu0 0
    %112 = vmatprep.subr.bf16.mxu0 0
    %113 = vmatpush1.bf16.msra.mxu0 0
    %114 = vmatprep.subr.bf16.mxu0 0
    %115 = vmatpush1.bf16.msra.mxu0 0
    %116 = vmatprep.subr.bf16.mxu0 0
    %117 = vmatpush1.bf16.msra.mxu0 0
    %118 = vmatprep.subr.bf16.mxu0 0
    %119 = vmatpush1.bf16.msra.mxu0 0
    %120 = vmatprep.subr.bf16.mxu0 0
    %121 = vmatpush1.bf16.msra.mxu0 0
    %122 = vmatprep.subr.bf16.mxu0 0
    %123 = vmatpush1.bf16.msra.mxu0 0
    %124 = vmatprep.subr.bf16.mxu0 0
    %125 = vmatpush1.bf16.msra.mxu0 0
    %126 = vmatprep.mubr.bf16.mxu0 0
    %127 = vmatmul.mubr.bf16.gmra.mrb[0].mxu0 %v92
    %v128 = vpop.f32.mrb[0].mxu0
    %v129 = vadd.f32 %v63, %v128
    %v130 = vpop.f32.mrb[0].mxu0
    %v131 = vadd.f32 %v67, %v130
    %v132 = vpop.f32.mrb[0].mxu0
    %v133 = vpop.f32.mrb[0].mxu0
    %134 = vdwg.mxu0
    %vm135 = vcmp.ge.f32.partialorder %v129, 0.0
    %vm136 = vcmp.ge.f32.partialorder %v131, 0.0
    %v137 = vmul.f32 %v129, 0.2
    %v138 = vmul.f32 %v131, 0.2
    %v139 = vsel %vm135, %v129, %v137
    %v140 = vsel %vm136, %v131, %v138
    %v143 = vcombine.low %v139, %v140
    %v145 = vunpack.c.l.s4 1983009808
    %v146 = vunpack.c.0.s8 %v145
    %v147 = vlaneseq
    %v148 = vshrl.u32 %v147, 7
    %v149 = vsub.s32 %v146, %v148
    %v150 = vrot.slane %v143, %v149
    %152 = vst [vmem:[#allocation7] sm:$0xf] %v150
    // Predicated region
    $region22: #{tpu_custom_call.1} parent=1 // pred_check
      _
    $region23: #{tpu_custom_call.1} parent=1 // pred_check_branch
      %154 = sbr.rel (0) target = $region25
    $region24: #{tpu_custom_call.1} parent=1 // pred_region
      %s156 = ssub.s32 64, 64
      %157 = vsyncadd [#allocation4], %s156
      %s159 = sshll.u32 [#allocation7], 4
      %s160 = int_to_ptr.vmem [resolvable:$true] %s159
      %162 = dma.vmem_to_hbm [thread:$0]  %s160, 64, %s3, [#allocation4]
    $region25: #{tpu_custom_call.1} parent=1 // pred_fallthru
      _
    // Predicated region
    $region26: #{tpu_custom_call.1} parent=1 // pred_check
      _
    $region27: #{tpu_custom_call.1} parent=1 // pred_check_branch
      %164 = sbr.rel (0) target = $region29
    $region28: #{tpu_custom_call.1} parent=1 // pred_region
      %165 = dma.done [#allocation4], 64
    $region29: #{tpu_custom_call.1} parent=1 // pred_fallthru
      _
    %166 = vsyncpa [#allocation3], 1
    %167 = vsyncpa [#allocation6], 1
    %168 = vsyncpa [#allocation4], 1

</llo_original>
